<compile_context>
chip_gen: v5e
topology: v5e:2x2
jax: 0.10.0
libtpu: 0.0.40
codegen_flags: <defaults>
</compile_context>

<pallas_src>
import functools

import jax
import jax.numpy as jnp
from jax.experimental import pallas as pl
from jax.experimental.pallas import tpu as pltpu

LN_EPS = 1e-5                        # nn.LayerNorm default
MATMUL_DTYPE = jnp.bfloat16          # MXU-native operand dtype (f32 accumulate)
ATTN_PROBS_DTYPE = jnp.bfloat16      # dtype of the returned attention maps
MASK_DTYPE = jnp.bfloat16            # (1 - mask); exact for {0,1} masks


def _vmem_limit_bytes():
    """Generation-aware scoped-VMEM limit (~75% of physical), with fallback."""
    try:
        info = pltpu.get_tpu_info()
        cap = getattr(info, "vmem_capacity_bytes", None)
        if cap:
            return int(cap) * 3 // 4
    except Exception:
        pass
    return 32 * 1024 * 1024          # conservative known-good fallback


VMEM_LIMIT_BYTES = _vmem_limit_bytes()


def _cparams(*dimension_semantics):
    return pltpu.CompilerParams(
        dimension_semantics=dimension_semantics,
        vmem_limit_bytes=VMEM_LIMIT_BYTES,
    )


def _largest_divisor_leq(n, cap):
    for c in range(min(n, max(1, cap)), 0, -1):
        if n % c == 0:
            return c
    return 1


def _pick_tile(n, candidates, *, min_steps=1, fits=None):
    """Largest candidate dividing n that fits the VMEM budget, preferring at
    least `min_steps` grid steps (megacore).  Falls back to the full dim."""
    usable = [c for c in candidates
              if c <= n and n % c == 0 and (fits is None or fits(c))]
    for c in usable:                              # candidates are descending
        if n // c >= min_steps:
            return c
    # TODO(synk): for ragged n (no suitable divisor) a pl.cdiv grid with
    # pl.when masking would keep >=2 parallel steps; full-dim fallback for now.
    return usable[0] if usable else n


# ----------------------------------------------------------------------------
# Pallas kernels
# ----------------------------------------------------------------------------
def _fused_proj_kernel(x_ref, w_ref, b_ref, *out_refs):
    # x: (TM, D) f32, w: (D, n*D) bf16, b: (1, n*D) f32 -> n outputs (TM, D).
    y = (
        jnp.dot(x_ref[...].astype(w_ref.dtype), w_ref[...],
                preferred_element_type=jnp.float32)
        + b_ref[...]
    )
    d = out_refs[0].shape[-1]
    for j, o_ref in enumerate(out_refs):
        o_ref[...] = y[:, j * d:(j + 1) * d].astype(o_ref.dtype)


def _attn_kernel(q_ref, k_ref, v_ref, ctx_ref, attn_ref, *, scale):
    q = q_ref[...]  # (G, TLq, d)
    k = k_ref[...]  # (G, Lk, d)
    v = v_ref[...]  # (G, Lk, d)
    s = jax.lax.dot_general(
        q, k, (((2,), (2,)), ((0,), (0,))), preferred_element_type=jnp.float32
    ) * scale
    m = jnp.max(s, axis=-1, keepdims=True)
    e = jnp.exp(s - m)
    p = e * pl.reciprocal(jnp.sum(e, axis=-1, keepdims=True), approx=True)
    attn_ref[...] = p.astype(attn_ref.dtype)
    ctx = jax.lax.dot_general(
        p.astype(v.dtype), v, (((2,), (1,)), ((0,), (0,))),
        preferred_element_type=jnp.float32,
    )
    ctx_ref[...] = ctx.astype(ctx_ref.dtype)


def _attn_kernel_masked(q_ref, k_ref, v_ref, nm_ref, ctx_ref, attn_ref, *,
                        scale, mask_rep):
    q = q_ref[...]    # (G, TLq, d)
    k = k_ref[...]    # (G, Lk, d)
    v = v_ref[...]    # (G, Lk, d)
    nm = nm_ref[...]  # (G // mask_rep, TLq, Lk): (1 - mask), bf16
    if mask_rep > 1:
        # Replicate the compact per-batch mask across the head group: row t of
        # the group uses mask[t % B], exactly reproducing torch's
        # attn_mask.repeat(num_heads, 1, 1) indexing against the row-major
        # `.view(B*H, -1, d)` data layout.
        nm = jnp.concatenate([nm] * mask_rep, axis=0)
    s = jax.lax.dot_general(
        q, k, (((2,), (2,)), ((0,), (0,))), preferred_element_type=jnp.float32
    ) * scale
    s = s * nm                                   # torch: attention * (1 - mask)
    m = jnp.max(s, axis=-1, keepdims=True)
    e = jnp.exp(s - m)
    p = e * pl.reciprocal(jnp.sum(e, axis=-1, keepdims=True), approx=True)
    p = p * nm                                   # torch: post-softmax masking
    # TODO(synk): torch's attention.clamp(min=1e-08) is non in-place and its
    # result is discarded -> it is a no-op, faithfully omitted here.
    attn_ref[...] = p.astype(attn_ref.dtype)
    ctx = jax.lax.dot_general(
        p.astype(v.dtype), v, (((2,), (1,)), ((0,), (0,))),
        preferred_element_type=jnp.float32,
    )
    ctx_ref[...] = ctx.astype(ctx_ref.dtype)


def _proj_residual_ln_kernel(x_ref, w_ref, b_ref, res_ref, g_ref, beta_ref, o_ref):
    # x (ctx) arrives already in MATMUL_DTYPE; residual / LN params are f32.
    y = (
        jnp.dot(x_ref[...].astype(w_ref.dtype), w_ref[...],
                preferred_element_type=jnp.float32)
        + b_ref[...]
    )
    z = res_ref[...] + y
    mu = jnp.mean(z, axis=-1, keepdims=True)
    var = jnp.mean(jnp.square(z - mu), axis=-1, keepdims=True)
    zn = (z - mu) * jax.lax.rsqrt(var + LN_EPS)
    o_ref[...] = (zn * g_ref[...] + beta_ref[...]).astype(o_ref.dtype)


def _ffn_kernel(x_ref, w1_ref, b1_ref, w2_ref, b2_ref, g_ref, beta_ref,
                o_ref, acc_ref, xb_ref):
    f = pl.program_id(1)

    @pl.when(f == 0)
    def _():
        acc_ref[...] = jnp.zeros_like(acc_ref)
        xb_ref[...] = x_ref[...].astype(xb_ref.dtype)   # hoisted bf16 cast

    h = (
        jnp.dot(xb_ref[...], w1_ref[...], preferred_element_type=jnp.float32)
        + b1_ref[...]
    )
    h = jnp.maximum(h, 0.0)                             # ReLU per F-chunk
    acc_ref[...] += jnp.dot(h.astype(w2_ref.dtype), w2_ref[...],
                            preferred_element_type=jnp.float32)

    @pl.when(f == pl.num_programs(1) - 1)
    def _():
        z = x_ref[...] + acc_ref[...] + b2_ref[...]
        mu = jnp.mean(z, axis=-1, keepdims=True)
        var = jnp.mean(jnp.square(z - mu), axis=-1, keepdims=True)
        o_ref[...] = ((z - mu) * jax.lax.rsqrt(var + LN_EPS) * g_ref[...]
                      + beta_ref[...]).astype(o_ref.dtype)


# ----------------------------------------------------------------------------
# pallas_call wrappers
# ----------------------------------------------------------------------------
def fused_proj(x, w, b, n_out):
    """x: (N, D) f32, w: (D, n_out*D) bf16, b: (1, n_out*D) -> n_out x (N, D) bf16."""
    N, D = x.shape
    budget = int(VMEM_LIMIT_BYTES * 0.6)
    # TODO(synk): the constant-index weight/bias blocks are still
    # double-buffered; pl.Buffered(1) (or tiling the weight's N dim) would
    # halve their VMEM footprint for very large D on v7x.
    w_bytes = 2 * (w.size * w.dtype.itemsize + b.size * b.dtype.itemsize)

    def fits(tm):
        per = 2 * tm * D * 4              # x in (f32), double-buffered
        per += 2 * n_out * tm * D * 2     # bf16 outputs, double-buffered
        return per + w_bytes <= budget

    TM = _pick_tile(N, (1024, 512, 256, 128, 64, 32, 16, 8),
                    min_steps=2, fits=fits)
    grid = (N // TM,)
    out_shape = tuple(
        jax.ShapeDtypeStruct((N, D), MATMUL_DTYPE) for _ in range(n_out)
    )
    out_specs = tuple(
        pl.BlockSpec((TM, D), lambda i: (i, 0)) for _ in range(n_out)
    )
    return pl.pallas_call(
        _fused_proj_kernel,
        out_shape=out_shape,
        grid=grid,
        in_specs=[
            pl.BlockSpec((TM, D), lambda i: (i, 0)),
            pl.BlockSpec((D, n_out * D), lambda i: (0, 0)),
            pl.BlockSpec((1, n_out * D), lambda i: (0, 0)),
        ],
        out_specs=out_specs,
        compiler_params=_cparams("parallel"),
    )(x, w, b)


def scaled_dot_attention(q, k, v, scale, notmask, num_heads):
    """q: (B*H, Lq, d), k/v: (B*H, Lk, d), notmask: (B, Lq, Lk) bf16 or None."""
    BH, Lq, d = q.shape
    Lk = k.shape[1]
    H = num_heads
    B = BH // H
    masked = notmask is not None
    compact = masked and (H % B == 0)

    # Head-group size G: large enough to batch the small per-head matmuls on
    # the MXU (target ~8); on the compact-mask path G must be a multiple of B
    # so every block starts at a row index that is 0 mod B.
    if compact:
        j = _largest_divisor_leq(H // B, max(1, 8 // B))
        G = B * j
    else:
        G = _largest_divisor_leq(H, 8)

    probs_bytes = jnp.dtype(ATTN_PROBS_DTYPE).itemsize
    budget = int(VMEM_LIMIT_BYTES * 0.6)

    def fits(tlq):
        per = 2 * 2 * G * Lk * d * 2           # k, v (bf16, double-buffered)
        per += 2 * G * tlq * d * 2             # q
        per += 2 * G * tlq * Lk * probs_bytes  # probability output
        per += 2 * G * tlq * d * 2             # ctx output
        per += G * tlq * Lk * 4                # live f32 scores
        per += 2 * max(B, G) * tlq * Lk * 2    # mask block
        return per <= budget

    # TODO(synk): the score matrix still scales with full Lk; a flash-style
    # Lk-tiled online softmax would bound it, but the normalized full attention
    # map (a module output) cannot then be emitted in a single pass.
    TLq = _pick_tile(Lq, (1024, 512, 256, 128), fits=fits)

    if B == 1 and (H // G) * (Lq // TLq) < 2 and H > 1:
        G = _largest_divisor_leq(H, max(1, G // 2))   # give megacore >=2 steps
    HG = H // G
    grid = (B, HG, Lq // TLq)

    q_spec = pl.BlockSpec((G, TLq, d), lambda b, g, lq: (b * HG + g, lq, 0))
    kv_spec = pl.BlockSpec((G, Lk, d), lambda b, g, lq: (b * HG + g, 0, 0))
    out_specs = (
        pl.BlockSpec((G, TLq, d), lambda b, g, lq: (b * HG + g, lq, 0)),
        pl.BlockSpec((G, TLq, Lk), lambda b, g, lq: (b * HG + g, lq, 0)),
    )
    out_shape = (
        jax.ShapeDtypeStruct((BH, Lq, d), MATMUL_DTYPE),       # ctx
        jax.ShapeDtypeStruct((BH, Lq, Lk), ATTN_PROBS_DTYPE),  # attention probs
    )

    if not masked:
        kernel = functools.partial(_attn_kernel, scale=scale)
        in_specs = [q_spec, kv_spec, kv_spec]
        args = (q, k, v)
    elif compact:
        kernel = functools.partial(_attn_kernel_masked, scale=scale,
                                   mask_rep=G // B)
        in_specs = [q_spec, kv_spec, kv_spec,
                    pl.BlockSpec((B, TLq, Lk), lambda b, g, lq: (0, lq, 0))]
        args = (q, k, v, notmask)
    else:
        # Faithful fallback when B does not divide H: torch's repeat(H,1,1)
        # interleaves batches within a head group (row % B), which cannot be a
        # contiguous block of the compact mask -> materialize the tiled mask
        # (bf16, half the old f32 footprint).
        tiled = jnp.tile(notmask, (H, 1, 1))
        kernel = functools.partial(_attn_kernel_masked, scale=scale, mask_rep=1)
        in_specs = [q_spec, kv_spec, kv_spec,
                    pl.BlockSpec((G, TLq, Lk),
                                 lambda b, g, lq: (b * HG + g, lq, 0))]
        args = (q, k, v, tiled)

    ctx, attn = pl.pallas_call(
        kernel,
        out_shape=out_shape,
        grid=grid,
        in_specs=in_specs,
        out_specs=out_specs,
        compiler_params=_cparams("parallel", "parallel", "parallel"),
    )(*args)
    return ctx, attn


def proj_residual_ln(x, w, b, residual, g, beta):
    # x: (N, D) bf16 (attention ctx), w: (D, D) bf16, residual: (N, D) f32.
    N, D = residual.shape
    budget = int(VMEM_LIMIT_BYTES * 0.6)
    w_bytes = 2 * (D * D * 2 + 3 * D * 4)

    def fits(tm):
        per = 2 * tm * D * 2   # ctx in (bf16)
        per += 2 * tm * D * 4  # residual in (f32)
        per += 2 * tm * D * 4  # out (f32)
        return per + w_bytes <= budget

    TM = _pick_tile(N, (1024, 512, 256, 128, 64, 32, 16, 8),
                    min_steps=2, fits=fits)
    grid = (N // TM,)
    return pl.pallas_call(
        _proj_residual_ln_kernel,
        out_shape=jax.ShapeDtypeStruct((N, D), jnp.float32),
        grid=grid,
        in_specs=[
            pl.BlockSpec((TM, D), lambda i: (i, 0)),
            pl.BlockSpec((D, D), lambda i: (0, 0)),
            pl.BlockSpec((1, D), lambda i: (0, 0)),
            pl.BlockSpec((TM, D), lambda i: (i, 0)),
            pl.BlockSpec((1, D), lambda i: (0, 0)),
            pl.BlockSpec((1, D), lambda i: (0, 0)),
        ],
        out_specs=pl.BlockSpec((TM, D), lambda i: (i, 0)),
        compiler_params=_cparams("parallel"),
    )(x, w, b, residual, g, beta)


def ffn(x, w1, b1, w2, b2, g, beta):
    # x: (N, D) f32, w1: (D, F) bf16, w2: (F, D) bf16.
    N, D = x.shape
    F = w1.shape[1]
    budget = int(VMEM_LIMIT_BYTES * 0.6)

    def tf_fits(tf):
        return 2 * (D * tf + tf * D) * 2 + 2 * tf * 4 <= budget // 2

    TF = _pick_tile(F, (2048, 1024, 512, 256, 128), fits=tf_fits)
    w_bytes = 2 * (D * TF + TF * D) * 2 + 2 * TF * 4 + 3 * 2 * D * 4

    def tm_fits(tm):
        per = 2 * tm * D * 4          # x (f32), double-buffered
        per += 2 * tm * D * 4         # out (f32)
        per += tm * D * 4 + tm * D * 2  # acc (f32) + cached bf16 x scratch
        per += tm * TF * 4            # live f32 hidden chunk
        return per + w_bytes <= budget

    TM = _pick_tile(N, (1024, 512, 256, 128, 64, 32, 16, 8),
                    min_steps=2, fits=tm_fits)
    grid = (N // TM, F // TF)
    return pl.pallas_call(
        _ffn_kernel,
        out_shape=jax.ShapeDtypeStruct((N, D), jnp.float32),
        grid=grid,
        in_specs=[
            pl.BlockSpec((TM, D), lambda i, f: (i, 0)),
            pl.BlockSpec((D, TF), lambda i, f: (0, f)),
            pl.BlockSpec((1, TF), lambda i, f: (0, f)),
            pl.BlockSpec((TF, D), lambda i, f: (f, 0)),
            pl.BlockSpec((1, D), lambda i, f: (0, 0)),
            pl.BlockSpec((1, D), lambda i, f: (0, 0)),
            pl.BlockSpec((1, D), lambda i, f: (0, 0)),
        ],
        out_specs=pl.BlockSpec((TM, D), lambda i, f: (i, 0)),
        scratch_shapes=[pltpu.VMEM((TM, D), jnp.float32),
                        pltpu.VMEM((TM, D), MATMUL_DTYPE)],
        compiler_params=_cparams("parallel", "arbitrary"),
    )(x, w1, b1, w2, b2, g, beta)


# ----------------------------------------------------------------------------
# Module-level forward (glue in plain JAX, hot paths in Pallas)
# ----------------------------------------------------------------------------
def _project_kvq(p, key, value, query):
    """K/V/Q projections, fused whenever inputs are shared (self/cross attn)."""
    B, Lq, D = query.shape
    Lk, Lv = key.shape[1], value.shape[1]
    w, b = p["w_kvq"], p["b_kvq"]            # (D, 3D) bf16 / (1, 3D) f32 [K|V|Q]
    if key is value and value is query:      # self-attention: one (D,3D) matmul
        k, v, q = fused_proj(query.reshape(B * Lq, D), w, b, 3)
    elif key is value:                       # cross-attention: (D,2D) + (D,D)
        k, v = fused_proj(key.reshape(B * Lk, D), w[:, :2 * D], b[:, :2 * D], 2)
        (q,) = fused_proj(query.reshape(B * Lq, D), w[:, 2 * D:], b[:, 2 * D:], 1)
    else:                                    # fully distinct inputs
        (k,) = fused_proj(key.reshape(B * Lk, D), w[:, :D], b[:, :D], 1)
        (v,) = fused_proj(value.reshape(B * Lv, D), w[:, D:2 * D], b[:, D:2 * D], 1)
        (q,) = fused_proj(query.reshape(B * Lq, D), w[:, 2 * D:], b[:, 2 * D:], 1)
    return k, v, q


def multi_head_attention(p, key, value, query, notmask, num_heads):
    B, Lq, D = query.shape
    Lk = key.shape[1]
    d = D // num_heads
    residual = query.reshape(B * Lq, D)

    k, v, q = _project_kvq(p, key, value, query)

    # torch .view(B*H, -1, d) on contiguous (B, L, H*d) == row-major reshape.
    # TODO(synk): these reshapes change the lane (minor) dim D -> d, so XLA
    # inserts relayout copies between pallas_calls; doing the reshape inside
    # the attention kernel would need Mosaic minor-dim reshapes that are not
    # reliably supported for d < 128, so it is left to XLA here.
    k = k.reshape(B * num_heads, Lk, d)
    v = v.reshape(B * num_heads, Lk, d)
    q = q.reshape(B * num_heads, Lq, d)

    scale = float(d) ** (-0.5)
    ctx, attn = scaled_dot_attention(q, k, v, scale, notmask, num_heads)

    ctx = ctx.reshape(B * Lq, D)  # torch .view(B, -1, H*d) then flatten tokens
    out = proj_residual_ln(ctx, p["wf"], p["bf"], residual, p["ln_g"], p["ln_b"])
    # dropout p=0.0 -> identity
    return out.reshape(B, Lq, D), attn


def feed_forward(p, x):
    B, L, D = x.shape
    out = ffn(
        x.reshape(B * L, D),
        p["w1"], p["b1"], p["w2"], p["b2"], p["ln_g"], p["ln_b"],
    )
    return out.reshape(B, L, D)


def decoder_layer(params, dec_inputs, enc_outputs, masks=None, num_heads=8):
    notmask = None
    if masks is not None:
        # (1 - mask) computed ONCE at its compact (B, Lq, Lk) shape and shared
        # by both attention blocks; the H-fold replication torch builds with
        # .repeat(num_heads, 1, 1) is reproduced inside the attention kernel
        # (or, when B does not divide H, by a bf16 tile in the wrapper).
        notmask = (1.0 - masks.astype(jnp.float32)).astype(MASK_DTYPE)

    # self-attention (shared weights with cross-attention, as in the module)
    dec_output, self_attention = multi_head_attention(
        params["attn"], dec_inputs, dec_inputs, dec_inputs, notmask, num_heads
    )
    # cross-attention: key=value=enc_outputs, query=dec_output
    dec_output, context_attention = multi_head_attention(
        params["attn"], enc_outputs, enc_outputs, dec_output, notmask, num_heads
    )
    dec_output = feed_forward(params["ffn"], dec_output)
    return dec_output, self_attention, context_attention


# ----------------------------------------------------------------------------
# Deterministic parameter init
# ----------------------------------------------------------------------------
def init_params(key, model_dim, num_heads, ffn_dim):
    ks = jax.random.split(key, 8)
    s = 0.1

    def lin(k, din, dout):
        kw, kb = jax.random.split(k)
        return (
            s * jax.random.normal(kw, (din, dout), jnp.float32),
            s * jax.random.normal(kb, (1, dout), jnp.float32),
        )

    wk, bk = lin(ks[0], model_dim, model_dim)
    wv, bv = lin(ks[1], model_dim, model_dim)
    wq, bq = lin(ks[2], model_dim, model_dim)
    wf, bf = lin(ks[3], model_dim, model_dim)
    w1, b1 = lin(ks[4], model_dim, ffn_dim)   # Conv1d(model_dim, ffn_dim, 1)
    w2, b2 = lin(ks[5], ffn_dim, model_dim)   # Conv1d(ffn_dim, model_dim, 1)

    # Matmul weights stored in MXU-native dtype; biases / LN params stay f32.
    w_kvq = jnp.concatenate([wk, wv, wq], axis=1).astype(MATMUL_DTYPE)
    b_kvq = jnp.concatenate([bk, bv, bq], axis=1)
    return {
        "attn": {
            "w_kvq": w_kvq, "b_kvq": b_kvq,               # fused [K | V | Q]
            "wf": wf.astype(MATMUL_DTYPE), "bf": bf,
            "ln_g": jnp.ones((1, model_dim), jnp.float32),
            "ln_b": jnp.zeros((1, model_dim), jnp.float32),
        },
        "ffn": {
            "w1": w1.astype(MATMUL_DTYPE), "b1": b1,
            "w2": w2.astype(MATMUL_DTYPE), "b2": b2,
            "ln_g": jnp.ones((1, model_dim), jnp.float32),
            "ln_b": jnp.zeros((1, model_dim), jnp.float32),
        },
    }


if __name__ == "__main__":
    B, L, D, H, FFN = 2, 8, 32, 8, 64

    root = jax.random.PRNGKey(0)
    k_par, k_dec, k_enc, k_msk = jax.random.split(root, 4)

    params = init_params(k_par, D, H, FFN)
    dec_inputs = jax.random.normal(k_dec, (B, L, D), jnp.float32)
    enc_outputs = jax.random.normal(k_enc, (B, L, D), jnp.float32)
    masks = (jax.random.uniform(k_msk, (B, L, L)) < 0.2).astype(jnp.float32)

    out, self_attn, ctx_attn = decoder_layer(
        params, dec_inputs, enc_outputs, masks, num_heads=H
    )
    jax.block_until_ready((out, self_attn, ctx_attn))

    assert out.shape == (B, L, D)
    assert self_attn.shape == (B * H, L, L)
    assert ctx_attn.shape == (B * H, L, L)
    assert out.dtype == jnp.float32
    print("KERNEL_OK")
</pallas_src>

<mosaic_0001>
module attributes {stable_mosaic.version = 11 : i64} {
  func.func @_fused_proj_kernel(%arg0: i32, %arg1: memref<8x32xf32, #tpu.memory_space<vmem>>, %arg2: memref<32x96xbf16, #tpu.memory_space<vmem>>, %arg3: memref<1x96xf32, #tpu.memory_space<vmem>>, %arg4: memref<8x32xbf16, #tpu.memory_space<vmem>>, %arg5: memref<8x32xbf16, #tpu.memory_space<vmem>>, %arg6: memref<8x32xbf16, #tpu.memory_space<vmem>>) attributes {dimension_semantics = [#tpu.dimension_semantics<parallel>], iteration_bounds = array<i64: 2>, scalar_prefetch = 0 : i64, scratch_operands = 0 : i64, tpu.core_type = #tpu.core_type<tc>, window_params = [{transform_indices = @transform_0, window_bounds = array<i64: 8, 32>}, {pipeline_mode = #tpu.pipeline_mode<synchronous>, transform_indices = @transform_1, window_bounds = array<i64: 32, 96>}, {pipeline_mode = #tpu.pipeline_mode<synchronous>, transform_indices = @transform_2, window_bounds = array<i64: 1, 96>}, {transform_indices = @transform_3, window_bounds = array<i64: 8, 32>}, {transform_indices = @transform_4, window_bounds = array<i64: 8, 32>}, {transform_indices = @transform_5, window_bounds = array<i64: 8, 32>}]} {
    %c0 = arith.constant 0 : index
    %c0_0 = arith.constant 0 : index
    %0 = vector.load %arg1[%c0, %c0_0] : memref<8x32xf32, #tpu.memory_space<vmem>>, vector<8x32xf32>
    %1 = arith.truncf %0 : vector<8x32xf32> to vector<8x32xbf16>
    %c0_1 = arith.constant 0 : index
    %c0_2 = arith.constant 0 : index
    %2 = vector.load %arg2[%c0_1, %c0_2] : memref<32x96xbf16, #tpu.memory_space<vmem>>, vector<32x96xbf16>
    %cst = arith.constant dense<0.000000e+00> : vector<8x96xf32>
    %3 = tpu.matmul %1, %2, %cst {dimension_numbers = #tpu.dot_dimension_numbers<[1], [0], [0], [1], [0, 0, 1, 1], [], []>} : vector<8x32xbf16>, vector<32x96xbf16>, vector<8x96xf32> -> vector<8x96xf32>
    %c0_3 = arith.constant 0 : index
    %c0_4 = arith.constant 0 : index
    %4 = vector.load %arg3[%c0_3, %c0_4] : memref<1x96xf32, #tpu.memory_space<vmem>>, vector<1x96xf32>
    %5 = vector.broadcast %4 : vector<1x96xf32> to vector<8x96xf32>
    %6 = arith.addf %3, %5 : vector<8x96xf32>
    %7 = vector.extract_strided_slice %6 {offsets = [0, 0], sizes = [8, 32], strides = [1, 1]} : vector<8x96xf32> to vector<8x32xf32>
    %8 = arith.truncf %7 : vector<8x32xf32> to vector<8x32xbf16>
    %c0_5 = arith.constant 0 : index
    %c0_6 = arith.constant 0 : index
    %9 = vector.load %arg4[%c0_5, %c0_6] : memref<8x32xbf16, #tpu.memory_space<vmem>>, vector<8x32xbf16>
    tpu.vector_store %arg4[%c0_5, %c0_6], %8 {strides = array<i32>} : memref<8x32xbf16, #tpu.memory_space<vmem>>, vector<8x32xbf16>,
    %10 = vector.extract_strided_slice %6 {offsets = [0, 32], sizes = [8, 32], strides = [1, 1]} : vector<8x96xf32> to vector<8x32xf32>
    %11 = arith.truncf %10 : vector<8x32xf32> to vector<8x32xbf16>
    %c0_7 = arith.constant 0 : index
    %c0_8 = arith.constant 0 : index
    %12 = vector.load %arg5[%c0_7, %c0_8] : memref<8x32xbf16, #tpu.memory_space<vmem>>, vector<8x32xbf16>
    tpu.vector_store %arg5[%c0_7, %c0_8], %11 {strides = array<i32>} : memref<8x32xbf16, #tpu.memory_space<vmem>>, vector<8x32xbf16>,
    %13 = vector.extract_strided_slice %6 {offsets = [0, 64], sizes = [8, 32], strides = [1, 1]} : vector<8x96xf32> to vector<8x32xf32>
    %14 = arith.truncf %13 : vector<8x32xf32> to vector<8x32xbf16>
    %c0_9 = arith.constant 0 : index
    %c0_10 = arith.constant 0 : index
    %15 = vector.load %arg6[%c0_9, %c0_10] : memref<8x32xbf16, #tpu.memory_space<vmem>>, vector<8x32xbf16>
    tpu.vector_store %arg6[%c0_9, %c0_10], %14 {strides = array<i32>} : memref<8x32xbf16, #tpu.memory_space<vmem>>, vector<8x32xbf16>,
    return
  }
  func.func @transform_0(%arg0: i32) -> (i32, i32) {
    %c0_i32 = arith.constant 0 : i32
    %c0_i32_0 = arith.constant 0 : i32
    return %arg0, %c0_i32 : i32, i32
  }
  func.func @transform_1(%arg0: i32) -> (i32, i32) {
    %c0_i32 = arith.constant 0 : i32
    %c0_i32_0 = arith.constant 0 : i32
    %c0_i32_1 = arith.constant 0 : i32
    return %c0_i32, %c0_i32_0 : i32, i32
  }
  func.func @transform_2(%arg0: i32) -> (i32, i32) {
    %c0_i32 = arith.constant 0 : i32
    %c0_i32_0 = arith.constant 0 : i32
    %c0_i32_1 = arith.constant 0 : i32
    return %c0_i32, %c0_i32_0 : i32, i32
  }
  func.func @transform_3(%arg0: i32) -> (i32, i32) {
    %c0_i32 = arith.constant 0 : i32
    %c0_i32_0 = arith.constant 0 : i32
    return %arg0, %c0_i32 : i32, i32
  }
  func.func @transform_4(%arg0: i32) -> (i32, i32) {
    %c0_i32 = arith.constant 0 : i32
    %c0_i32_0 = arith.constant 0 : i32
    return %arg0, %c0_i32 : i32, i32
  }
  func.func @transform_5(%arg0: i32) -> (i32, i32) {
    %c0_i32 = arith.constant 0 : i32
    %c0_i32_0 = arith.constant 0 : i32
    return %arg0, %c0_i32 : i32, i32
  }
}

</mosaic_0001>

<llo_original>
// kernel: tpu_custom_call.1
$region0: #{tpu_custom_call.1}
  #allocation0 [shape = 'u32[]', space=smem, size = 0x4, offset = 0x4, fixed_abs, tag = 'smem constant byte address 0x4 - core index']
  #allocation1 [shape = 'u32[72,128]{1,0:T(1,128)}', space=vmem, size = 0x9000, scoped, tag = 'internal scratch']
  %s0 = inlined_call_operand.hbm [shape: f32[16,32], index: 0, kind: input, shape index: {}]
  %s1 = inlined_call_operand.hbm [shape: bf16[32,96], index: 1, kind: input, shape index: {}]
  %s2 = inlined_call_operand.vmem [shape: f32[1,96], index: 2, kind: input, shape index: {}]
  %s3 = inlined_call_operand.hbm [shape: bf16[16,32], index: 3, kind: output, shape index: {0}]
  %s4 = inlined_call_operand.hbm [shape: bf16[16,32], index: 4, kind: output, shape index: {1}]
  %s5 = inlined_call_operand.hbm [shape: bf16[16,32], index: 5, kind: output, shape index: {2}]
  %6 = xla_tuple %s3, %s4, %s5
  %s7 = sld [smem:[#allocation0]]
  $region69: #{tpu_custom_call.1} parent=0
    _
  %s9 = ssub.s32 1, %s7
  %s10 = scalar_select 0, %s9, %s7
  $region1: #{tpu_custom_call.1} parent=0
    #allocation2 [shape = 'u8[8192]{0}', space=vmem, size = 0x2000, scoped, tag = 'input window, operand 0']
    #allocation3 [shape = 's32[2]{0}', space=sflag, size = 0x8, scoped, tag = 'scoped memory for tpu_custom_call.1']
    #allocation4 [shape = 's32[2]{0}', space=sflag, size = 0x8, scoped, tag = 'scoped memory for tpu_custom_call.1']
    #allocation5 [shape = 'u8[8192]{0}', space=vmem, size = 0x2000, scoped, tag = 'input window, operand 1, single buffered']
    #allocation6 [shape = 's32[1]{0}', space=sflag, size = 0x4, scoped, tag = 'scoped memory for tpu_custom_call.1']
    #allocation7 [shape = 'u8[4096]{0}', space=vmem, size = 0x1000, scoped, tag = 'output window, operand 0']
    #allocation8 [shape = 'u8[4096]{0}', space=vmem, size = 0x1000, scoped, tag = 'output window, operand 1']
    #allocation9 [shape = 's32[2]{0}', space=sflag, size = 0x8, scoped, tag = 'scoped memory for tpu_custom_call.1']
    #allocation10 [shape = 'u8[4096]{0}', space=vmem, size = 0x1000, scoped, tag = 'output window, operand 2']
    %11 = vsyncpa [#allocation3], 0
    %s12 = scalar_lea.sflag [#allocation3], 1
    %13 = vsyncpa %s12, 0
    %14 = vsyncpa [#allocation6], 0
    %15 = vsyncpa [#allocation4], 0
    %s16 = scalar_lea.sflag [#allocation4], 1
    %17 = vsyncpa %s16, 0
    %18 = vsyncpa [#allocation9], 0
    %s19 = scalar_lea.sflag [#allocation9], 1
    %20 = vsyncpa %s19, 0
    loop: start=0, step=1, limit=4
    $region2: #{tpu_custom_call.1} parent=1 // loop_pre_header
      _
    $region3: #{tpu_custom_call.1} parent=1 // loop_header
      %s22 = sphi 0, %s26
      %p23 = scmp.ge.s32.totalorder %s22, 4
      %s32 = sphi 0, %s34
      %s35 = sphi 0, %s32
      %s36 = sphi 0, %s35
      %s52 = sphi 0, %s36
      %s56 = sphi 0, %s56
      %s58 = sphi 0, %s56
      %s59 = sphi 0, %s58
      %s73 = sphi 0, %s59
      %s77 = sphi 0, %s77
      %s79 = sphi 0, %s77
      %s80 = sphi 0, %s79
      %s94 = sphi 0, %s80
      %s100 = sphi 0, %s102
      %s103 = sphi 0, %s100
      %s104 = sphi 0, %s103
      %s120 = sphi 0, %s104
      %s126 = sphi 0, %s128
      %s129 = sphi 0, %s126
      %s130 = sphi 0, %s129
      %s146 = sphi 0, %s130
      %s152 = sphi 0, %s154
      %s155 = sphi 0, %s152
      %s156 = sphi 0, %s155
      %s172 = sphi 0, %s156
    $region4: #{tpu_custom_call.1} parent=1 // loop_header_branch
      %25 = sbr.rel (%p23) target = $region8
    $region5: #{tpu_custom_call.1} parent=1 // loop_body
      %s27 = ssub.s32 %s22, 1
      %s28 = ssub.s32 %s22, 2
      %s29 = sadd.s32 %s22, 1
      %s30 = ssub.s32 %s22, %s29
      %p31 = scmp.eq.s32.totalorder %s30, 0
      %s33 = sadd.s32 %s32, 1
      %s34 = scalar_select %p31, %s32, %s33
      %p37 = pneg %p31
      %p38 = scmp.eq.s32.totalorder %s22, 1
      %p39 = por %p37, %p38
      %p40 = scmp.ne.s32.totalorder %s32, %s35
      %p41 = scmp.eq.s32.totalorder %s22, 0
      %p42 = por %p40, %p41
      %p43 = scmp.ne.s32.totalorder %s32, %s35
      %p44 = scmp.eq.s32.totalorder %s27, 1
      %p45 = por %p43, %p44
      %p46 = scmp.ne.s32.totalorder %s35, %s36
      %p47 = scmp.eq.s32.totalorder %s27, 0
      %p48 = por %p46, %p47
      %p49 = scmp.ne.s32.totalorder %s35, %s36
      %p50 = scmp.eq.s32.totalorder %s28, 1
      %p51 = por %p49, %p50
      %p53 = scmp.ne.s32.totalorder %s36, %s52
      %p54 = scmp.eq.s32.totalorder %s28, 0
      %p55 = por %p53, %p54
      %s57 = sadd.s32 %s56, 1
      %p60 = scmp.eq.s32.totalorder %s22, 1
      %p61 = scmp.ne.s32.totalorder %s56, %s58
      %p62 = scmp.eq.s32.totalorder %s22, 0
      %p63 = por %p61, %p62
      %p64 = scmp.ne.s32.totalorder %s56, %s58
      %p65 = scmp.eq.s32.totalorder %s27, 1
      %p66 = por %p64, %p65
      %p67 = scmp.ne.s32.totalorder %s58, %s59
      %p68 = scmp.eq.s32.totalorder %s27, 0
      %p69 = por %p67, %p68
      %p70 = scmp.ne.s32.totalorder %s58, %s59
      %p71 = scmp.eq.s32.totalorder %s28, 1
      %p72 = por %p70, %p71
      %p74 = scmp.ne.s32.totalorder %s59, %s73
      %p75 = scmp.eq.s32.totalorder %s28, 0
      %p76 = por %p74, %p75
      %s78 = sadd.s32 %s77, 1
      %p81 = scmp.eq.s32.totalorder %s22, 1
      %p82 = scmp.ne.s32.totalorder %s77, %s79
      %p83 = scmp.eq.s32.totalorder %s22, 0
      %p84 = por %p82, %p83
      %p85 = scmp.ne.s32.totalorder %s77, %s79
      %p86 = scmp.eq.s32.totalorder %s27, 1
      %p87 = por %p85, %p86
      %p88 = scmp.ne.s32.totalorder %s79, %s80
      %p89 = scmp.eq.s32.totalorder %s27, 0
      %p90 = por %p88, %p89
      %p91 = scmp.ne.s32.totalorder %s79, %s80
      %p92 = scmp.eq.s32.totalorder %s28, 1
      %p93 = por %p91, %p92
      %p95 = scmp.ne.s32.totalorder %s80, %s94
      %p96 = scmp.eq.s32.totalorder %s28, 0
      %p97 = por %p95, %p96
      %s98 = ssub.s32 %s22, %s29
      %p99 = scmp.eq.s32.totalorder %s98, 0
      %s101 = sadd.s32 %s100, 1
      %s102 = scalar_select %p99, %s100, %s101
      %p105 = pneg %p99
      %p106 = scmp.eq.s32.totalorder %s22, 1
      %p107 = por %p105, %p106
      %p108 = scmp.ne.s32.totalorder %s100, %s103
      %p109 = scmp.eq.s32.totalorder %s22, 0
      %p110 = por %p108, %p109
      %p111 = scmp.ne.s32.totalorder %s100, %s103
      %p112 = scmp.eq.s32.totalorder %s27, 1
      %p113 = por %p111, %p112
      %p114 = scmp.ne.s32.totalorder %s103, %s104
      %p115 = scmp.eq.s32.totalorder %s27, 0
      %p116 = por %p114, %p115
      %p117 = scmp.ne.s32.totalorder %s103, %s104
      %p118 = scmp.eq.s32.totalorder %s28, 1
      %p119 = por %p117, %p118
      %p121 = scmp.ne.s32.totalorder %s104, %s120
      %p122 = scmp.eq.s32.totalorder %s28, 0
      %p123 = por %p121, %p122
      %s124 = ssub.s32 %s22, %s29
      %p125 = scmp.eq.s32.totalorder %s124, 0
      %s127 = sadd.s32 %s126, 1
      %s128 = scalar_select %p125, %s126, %s127
      %p131 = pneg %p125
      %p132 = scmp.eq.s32.totalorder %s22, 1
      %p133 = por %p131, %p132
      %p134 = scmp.ne.s32.totalorder %s126, %s129
      %p135 = scmp.eq.s32.totalorder %s22, 0
      %p136 = por %p134, %p135
      %p137 = scmp.ne.s32.totalorder %s126, %s129
      %p138 = scmp.eq.s32.totalorder %s27, 1
      %p139 = por %p137, %p138
      %p140 = scmp.ne.s32.totalorder %s129, %s130
      %p141 = scmp.eq.s32.totalorder %s27, 0
      %p142 = por %p140, %p141
      %p143 = scmp.ne.s32.totalorder %s129, %s130
      %p144 = scmp.eq.s32.totalorder %s28, 1
      %p145 = por %p143, %p144
      %p147 = scmp.ne.s32.totalorder %s130, %s146
      %p148 = scmp.eq.s32.totalorder %s28, 0
      %p149 = por %p147, %p148
      %s150 = ssub.s32 %s22, %s29
      %p151 = scmp.eq.s32.totalorder %s150, 0
      %s153 = sadd.s32 %s152, 1
      %s154 = scalar_select %p151, %s152, %s153
      %p157 = pneg %p151
      %p158 = scmp.eq.s32.totalorder %s22, 1
      %p159 = por %p157, %p158
      %p160 = scmp.ne.s32.totalorder %s152, %s155
      %p161 = scmp.eq.s32.totalorder %s22, 0
      %p162 = por %p160, %p161
      %p163 = scmp.ne.s32.totalorder %s152, %s155
      %p164 = scmp.eq.s32.totalorder %s27, 1
      %p165 = por %p163, %p164
      %p166 = scmp.ne.s32.totalorder %s155, %s156
      %p167 = scmp.eq.s32.totalorder %s27, 0
      %p168 = por %p166, %p167
      %p169 = scmp.ne.s32.totalorder %s155, %s156
      %p170 = scmp.eq.s32.totalorder %s28, 1
      %p171 = por %p169, %p170
      %p173 = scmp.ne.s32.totalorder %s156, %s172
      %p174 = scmp.eq.s32.totalorder %s28, 0
      %p175 = por %p173, %p174
      %p176 = scmp.le.s32.totalorder 1, %s22
      %p177 = scmp.lt.s32.totalorder %s22, 3
      %p178 = pnand %p176, %p177
      %p179 = pneg %p178
      // Predicated region
      $region9: #{tpu_custom_call.1} parent=5 // pred_check
        _
      $region10: #{tpu_custom_call.1} parent=5 // pred_check_branch
        %181 = sbr.rel (%p178) target = $region12
      $region11: #{tpu_custom_call.1} parent=5 // pred_region
        %s182 = ssub.s32 %s22, 1
        // Predicated region
        $region13: #{tpu_custom_call.1} parent=11 // pred_check
          %p183 = pneg %p69
        $region14: #{tpu_custom_call.1} parent=11 // pred_check_branch
          %185 = sbr.rel (%p183) target = $region16
        $region15: #{tpu_custom_call.1} parent=11 // pred_region
          %187 = vsyncadd [#allocation6], 0
          %s188 = sshll.u32 %s1, 4
          %s189 = int_to_ptr.hbm [resolvable:$true] %s188
          %s190 = sshll.u32 [#allocation5], 4
          %s191 = int_to_ptr.vmem [resolvable:$true] %s190
          %196 = dma.hbm_to_vmem [thread:$0]  %s189, 256, %s191, [#allocation6], 64, 64, 4
        $region16: #{tpu_custom_call.1} parent=11 // pred_fallthru
          _
        // Predicated region
        $region17: #{tpu_custom_call.1} parent=11 // pred_check
          %p197 = pneg %p90
        $region18: #{tpu_custom_call.1} parent=11 // pred_check_branch
          %199 = sbr.rel (%p197) target = $region20
        $region19: #{tpu_custom_call.1} parent=11 // pred_region
          _
        $region20: #{tpu_custom_call.1} parent=11 // pred_fallthru
          _
      $region12: #{tpu_custom_call.1} parent=5 // pred_fallthru
        _
      %p200 = scmp.lt.s32.totalorder %s22, 2
      // Predicated region
      $region21: #{tpu_custom_call.1} parent=5 // pred_check
        %p201 = pneg %p200
      $region22: #{tpu_custom_call.1} parent=5 // pred_check_branch
        %203 = sbr.rel (%p201) target = $region24
      $region23: #{tpu_custom_call.1} parent=5 // pred_region
        // Predicated region
        $region25: #{tpu_custom_call.1} parent=23 // pred_check
          %p204 = pneg %p42
        $region26: #{tpu_custom_call.1} parent=23 // pred_check_branch
          %206 = sbr.rel (%p204) target = $region28
        $region27: #{tpu_custom_call.1} parent=23 // pred_region
          %s207 = sand.u32 %s32, 1
          %s208 = scalar_lea.sflag [#allocation3], %s207
          %s209 = sand.u32 %s32, 1
          %s210 = smul.addr %s209, 8
          %s211 = scalar_lea.vmem [#allocation2], %s210
          %213 = vsyncadd %s208, 0
          %s214 = smul.addr %s22, 8
          %s215 = scalar_lea.hbm %s0, %s214
          %s217 = sshll.u32 %s215, 4
          %s218 = int_to_ptr.hbm [resolvable:$true] %s217
          %s219 = sshll.u32 %s211, 4
          %s220 = int_to_ptr.vmem [resolvable:$true] %s219
          %222 = dma.hbm_to_vmem [thread:$0]  %s218, 128, %s220, %s208
        $region28: #{tpu_custom_call.1} parent=23 // pred_fallthru
          _
      $region24: #{tpu_custom_call.1} parent=5 // pred_fallthru
        _
      %p223 = scmp.le.s32.totalorder 1, %s22
      %p224 = scmp.lt.s32.totalorder %s22, 3
      %p225 = pnand %p223, %p224
      %p226 = pneg %p225
      // Predicated region
      $region29: #{tpu_custom_call.1} parent=5 // pred_check
        _
      $region30: #{tpu_custom_call.1} parent=5 // pred_check_branch
        %228 = sbr.rel (%p225) target = $region32
      $region31: #{tpu_custom_call.1} parent=5 // pred_region
        %s229 = ssub.s32 %s22, 1
        %s230 = sand.u32 %s35, 1
        %s231 = scalar_lea.sflag [#allocation3], %s230
        %s232 = sand.u32 %s35, 1
        %s233 = smul.addr %s232, 8
        %s234 = scalar_lea.vmem [#allocation2], %s233
        // Predicated region
        $region33: #{tpu_custom_call.1} parent=31 // pred_check
          %p235 = pneg %p48
        $region34: #{tpu_custom_call.1} parent=31 // pred_check_branch
          %237 = sbr.rel (%p235) target = $region36
        $region35: #{tpu_custom_call.1} parent=31 // pred_region
          %239 = dma.done %s231, 128
        $region36: #{tpu_custom_call.1} parent=31 // pred_fallthru
          _
        // Predicated region
        $region37: #{tpu_custom_call.1} parent=31 // pred_check
          %p240 = pneg %p69
        $region38: #{tpu_custom_call.1} parent=31 // pred_check_branch
          %242 = sbr.rel (%p240) target = $region40
        $region39: #{tpu_custom_call.1} parent=31 // pred_region
          %244 = dma.done [#allocation6], 256
        $region40: #{tpu_custom_call.1} parent=31 // pred_fallthru
          _
        %s245 = sand.u32 %s35, 1
        %s246 = scalar_lea.sflag [#allocation3], %s245
        %s247 = sand.u32 %s35, 1
        %s248 = smul.addr %s247, 8
        %s249 = scalar_lea.vmem [#allocation2], %s248
        %p250 = pneg %p48
        %p251 = pneg %p45
        %p252 = pneg %p69
        %p253 = pneg %p66
        %p254 = pneg %p90
        %p255 = pneg %p87
        %p256 = pneg %p116
        %p257 = pneg %p113
        %s258 = sand.u32 %s103, 1
        %s259 = scalar_lea.sflag [#allocation4], %s258
        %s260 = sand.u32 %s103, 1
        %s261 = smul.addr %s260, 4
        %s262 = scalar_lea.vmem [#allocation7], %s261
        %p263 = pneg %p142
        %p264 = pneg %p139
        %s265 = sand.u32 %s27, 1
        %s266 = scalar_lea.sflag [#allocation9], %s265
        %s267 = sand.u32 %s129, 1
        %s268 = smul.addr %s267, 4
        %s269 = scalar_lea.vmem [#allocation8], %s268
        %p270 = pneg %p168
        %p271 = pneg %p165
        %s272 = sand.u32 %s27, 1
        %s273 = scalar_lea.sflag [#allocation9], %s272
        %s274 = sand.u32 %s155, 1
        %s275 = smul.addr %s274, 4
        %s276 = scalar_lea.vmem [#allocation10], %s275
        %v278 = vld [vmem:[%s234] sm:$0xff]
        %v279 = vpack.c.bf16 %v278, %v278
        %v280 = vld [vmem:[#allocation5] sm:$0xf]
        %v281 = vld [vmem:[#allocation5 + $0x4] sm:$0xf]
        %v282 = vld [vmem:[#allocation5 + $0x8] sm:$0xf]
        %v283 = vld [vmem:[#allocation5 + $0xc] sm:$0xf]
        %v284 = vld [vmem:[%s2] sm:$0x1]
        %v286 = vperm.slane %v284, 0
        %v292 = vunpack.c.l.b16 %v280
        %v293 = vunpack.c.l.b16 %v281
        %v294 = vunpack.c.l.b16 %v282
        %v295 = vunpack.c.l.b16 %v283
        %v296 = vpack.c.b16 %v293, %v292
        %v297 = vpack.c.b16 %v295, %v294
        %vm300 = vcmask 261120
        %v302 = vsel %vm300, %v279, 0
        %304 = vmatpush.bf16.msra.mxu0 0
        %305 = vmatpush.bf16.msra.mxu0 0
        %306 = vmatpush.bf16.msra.mxu0 0
        %307 = vmatpush.bf16.msra.mxu0 0
        %308 = vmatpush.bf16.msra.mxu0 0
        %309 = vmatpush.bf16.msra.mxu0 0
        %310 = vmatpush.bf16.msra.mxu0 %v297
        %311 = vmatpush.bf16.msra.mxu0 %v296
        %312 = vmatmul.bf16.gmra.mxu0 %v302
        %v313 = vpop.f32.mrf.mxu0
        %v314 = vadd.f32 %v286, %v313
        %v315 = vpop.f32.mrf.mxu0
        %316 = vdwg.mxu0
        %v317 = vpack.c.bf16 %v314, %v314
        %vm318 = vcmask 257024
        %319 = vst.msk [vmem:[%s262] sm:$0xf] %vm318, %v317
        %321 = vrot.lane.b32.xlu0 %v317, 96
        %v322 = vpop.permute.xlu0 %321
        %324 = vst.msk [vmem:[%s269] sm:$0xf] %vm318, %v322
        %325 = vrot.lane.b32.xlu0 %v317, 64
        %v326 = vpop.permute.xlu0 %325
        %328 = vst.msk [vmem:[%s276] sm:$0xf] %vm318, %v326
        %s329 = sand.u32 %s103, 1
        %s330 = scalar_lea.sflag [#allocation4], %s329
        %s331 = sand.u32 %s103, 1
        %s332 = smul.addr %s331, 4
        %s333 = scalar_lea.vmem [#allocation7], %s332
        %s334 = sand.u32 %s27, 1
        %s335 = scalar_lea.sflag [#allocation9], %s334
        %s336 = sand.u32 %s129, 1
        %s337 = smul.addr %s336, 4
        %s338 = scalar_lea.vmem [#allocation8], %s337
        %s339 = sand.u32 %s27, 1
        %s340 = scalar_lea.sflag [#allocation9], %s339
        %s341 = sand.u32 %s155, 1
        %s342 = smul.addr %s341, 4
        %s343 = scalar_lea.vmem [#allocation10], %s342
        // Predicated region
        $region41: #{tpu_custom_call.1} parent=31 // pred_check
          %p344 = pneg %p113
        $region42: #{tpu_custom_call.1} parent=31 // pred_check_branch
          %346 = sbr.rel (%p344) target = $region44
        $region43: #{tpu_custom_call.1} parent=31 // pred_region
          %348 = vsyncadd %s330, 0
          %s349 = smul.addr %s27, 4
          %s350 = scalar_lea.hbm %s3, %s349
          %s352 = sshll.u32 %s333, 4
          %s353 = int_to_ptr.vmem [resolvable:$true] %s352
          %s354 = sshll.u32 %s350, 4
          %s355 = int_to_ptr.hbm [resolvable:$true] %s354
          %357 = dma.vmem_to_hbm [thread:$0]  %s353, 64, %s355, %s330
        $region44: #{tpu_custom_call.1} parent=31 // pred_fallthru
          _
        // Predicated region
        $region45: #{tpu_custom_call.1} parent=31 // pred_check
          %p358 = pneg %p139
        $region46: #{tpu_custom_call.1} parent=31 // pred_check_branch
          %360 = sbr.rel (%p358) target = $region48
        $region47: #{tpu_custom_call.1} parent=31 // pred_region
          %362 = vsyncadd %s335, 0
          %s363 = smul.addr %s27, 4
          %s364 = scalar_lea.hbm %s4, %s363
          %s366 = sshll.u32 %s338, 4
          %s367 = int_to_ptr.vmem [resolvable:$true] %s366
          %s368 = sshll.u32 %s364, 4
          %s369 = int_to_ptr.hbm [resolvable:$true] %s368
          %371 = dma.vmem_to_hbm [thread:$0]  %s367, 64, %s369, %s335
        $region48: #{tpu_custom_call.1} parent=31 // pred_fallthru
          _
        // Predicated region
        $region49: #{tpu_custom_call.1} parent=31 // pred_check
          %p372 = pneg %p165
        $region50: #{tpu_custom_call.1} parent=31 // pred_check_branch
          %374 = sbr.rel (%p372) target = $region52
        $region51: #{tpu_custom_call.1} parent=31 // pred_region
          %376 = vsyncadd %s340, 0
          %s377 = smul.addr %s27, 4
          %s378 = scalar_lea.hbm %s5, %s377
          %s380 = sshll.u32 %s343, 4
          %s381 = int_to_ptr.vmem [resolvable:$true] %s380
          %s382 = sshll.u32 %s378, 4
          %s383 = int_to_ptr.hbm [resolvable:$true] %s382
          %385 = dma.vmem_to_hbm [thread:$0]  %s381, 64, %s383, %s340
        $region52: #{tpu_custom_call.1} parent=31 // pred_fallthru
          _
      $region32: #{tpu_custom_call.1} parent=5 // pred_fallthru
        _
      %p386 = scmp.le.s32.totalorder 2, %s22
      // Predicated region
      $region53: #{tpu_custom_call.1} parent=5 // pred_check
        %p387 = pneg %p386
      $region54: #{tpu_custom_call.1} parent=5 // pred_check_branch
        %389 = sbr.rel (%p387) target = $region56
      $region55: #{tpu_custom_call.1} parent=5 // pred_region
        %s390 = ssub.s32 %s22, 2
        // Predicated region
        $region57: #{tpu_custom_call.1} parent=55 // pred_check
          %p391 = pneg %p119
        $region58: #{tpu_custom_call.1} parent=55 // pred_check_branch
          %393 = sbr.rel (%p391) target = $region60
        $region59: #{tpu_custom_call.1} parent=55 // pred_region
          %s394 = sand.u32 %s104, 1
          %s395 = scalar_lea.sflag [#allocation4], %s394
          %s396 = sand.u32 %s104, 1
          %s397 = smul.addr %s396, 4
          %s398 = scalar_lea.vmem [#allocation7], %s397
          %400 = dma.done %s395, 64
        $region60: #{tpu_custom_call.1} parent=55 // pred_fallthru
          _
        // Predicated region
        $region61: #{tpu_custom_call.1} parent=55 // pred_check
          %p401 = pneg %p145
        $region62: #{tpu_custom_call.1} parent=55 // pred_check_branch
          %403 = sbr.rel (%p401) target = $region64
        $region63: #{tpu_custom_call.1} parent=55 // pred_region
          %s404 = sand.u32 %s28, 1
          %s405 = scalar_lea.sflag [#allocation9], %s404
          %s406 = sand.u32 %s130, 1
          %s407 = smul.addr %s406, 4
          %s408 = scalar_lea.vmem [#allocation8], %s407
          %410 = dma.done %s405, 64
        $region64: #{tpu_custom_call.1} parent=55 // pred_fallthru
          _
        // Predicated region
        $region65: #{tpu_custom_call.1} parent=55 // pred_check
          %p411 = pneg %p171
        $region66: #{tpu_custom_call.1} parent=55 // pred_check_branch
          %413 = sbr.rel (%p411) target = $region68
        $region67: #{tpu_custom_call.1} parent=55 // pred_region
          %s414 = sand.u32 %s28, 1
          %s415 = scalar_lea.sflag [#allocation9], %s414
          %s416 = sand.u32 %s156, 1
          %s417 = smul.addr %s416, 4
          %s418 = scalar_lea.vmem [#allocation10], %s417
          %420 = dma.done %s415, 64
        $region68: #{tpu_custom_call.1} parent=55 // pred_fallthru
          _
      $region56: #{tpu_custom_call.1} parent=5 // pred_fallthru
        _
    $region6: #{tpu_custom_call.1} parent=1 // loop_footer
      %s26 = sadd.s32 1, %s22
    $region7: #{tpu_custom_call.1} parent=1 // loop_footer_branch
      %21 = sbr.rel target = $region3
    $region8: #{tpu_custom_call.1} parent=1 // loop_exit
      _
    %421 = vsyncpa [#allocation3], 1
    %s422 = scalar_lea.sflag [#allocation3], 1
    %423 = vsyncpa %s422, 1
    %424 = vsyncpa [#allocation6], 1
    %425 = vsyncpa [#allocation4], 1
    %s426 = scalar_lea.sflag [#allocation4], 1
    %427 = vsyncpa %s426, 1
    %428 = vsyncpa [#allocation9], 1
    %s429 = scalar_lea.sflag [#allocation9], 1
    %430 = vsyncpa %s429, 1

</llo_original>
